<compile_context>
chip_gen: v6e
topology: v6e:2x2x1
jax: 0.10.0
libtpu: 0.0.40
codegen_flags: <defaults>
</compile_context>

<pallas_src>
import functools

import jax
import jax.numpy as jnp
from jax.experimental import pallas as pl
from jax.experimental.pallas import tpu as pltpu


# ---------------------------------------------------------------------------
# Math helpers
# ---------------------------------------------------------------------------
def _log_softmax(x, axis):
    m = jnp.max(x, axis=axis, keepdims=True)
    z = x - m
    return z - jnp.log(jnp.sum(jnp.exp(z), axis=axis, keepdims=True))


def _bce_pointwise(x, y):
    # Numerically stable BCE-with-logits (matches torch.nn.BCEWithLogitsLoss)
    return jnp.maximum(x, 0.0) - x * y + jnp.log1p(jnp.exp(-jnp.abs(x)))


def _kl_pointwise(logp, y):
    # PyTorch KLDivLoss pointwise: y * (log(y) - logp), with 0*log(0) := 0.
    # (Used only by the pure-JAX reference.)
    safe_y = jnp.where(y > 0, y, 1.0)
    return jnp.where(y > 0, y * (jnp.log(safe_y) - logp), 0.0)


# ---------------------------------------------------------------------------
# Fused Pallas kernel: all four partial sums in one launch
# ---------------------------------------------------------------------------
def _fused_loss_kernel(xc_ref, xs_ref, yt_ref, ys_ref, out_ref, *, wm):
    """Fused clipwise + segmentwise partial sums.

    xc_ref : (C, B)     clipwise logits   (classes on sublanes, batch on lanes)
    xs_ref : (C, B*Wm)  windowed segmentwise logits (batch*time on lanes)
    yt_ref : (C, B)     target class probabilities
    ys_ref : (C, B*Wm)  target broadcast over the window (layout plumbing)
    out_ref: (1, 4)     [kl_clip_sum, bce_clip_sum, kl_seg_sum, bce_seg_sum]
    """
    xc = xc_ref[...].astype(jnp.float32)
    xs = xs_ref[...].astype(jnp.float32)
    yt = yt_ref[...].astype(jnp.float32)
    ys = ys_ref[...].astype(jnp.float32)

    # class softmax == sublane (axis 0) reduction in this layout
    logp_c = _log_softmax(xc, axis=0)
    logp_s = _log_softmax(xs, axis=0)

    # Hoisted target-entropy term: y*log(y) computed once on the narrow (C, B)
    # slab (0*log(0) := 0), reused by both KL sums.
    safe_y = jnp.where(yt > 0, yt, 1.0)
    sum_ylogy = jnp.sum(jnp.where(yt > 0, yt * jnp.log(safe_y), 0.0))

    # KL sum = sum(y*log y) - sum(y*log p)   (y==0 rows contribute 0 exactly,
    # since log p is finite).  Segmentwise: each window step repeats y.
    kl_clip = sum_ylogy - jnp.sum(yt * logp_c)
    kl_seg = wm * sum_ylogy - jnp.sum(ys * logp_s)

    bce_clip = jnp.sum(_bce_pointwise(xc, yt))
    bce_seg = jnp.sum(_bce_pointwise(xs, ys))

    # Pack the four scalars into a single (1, 4) row -> one writeback DMA.
    lane = jax.lax.broadcasted_iota(jnp.int32, (1, 4), 1)
    out_ref[...] = (jnp.where(lane == 0, kl_clip, 0.0)
                    + jnp.where(lane == 1, bce_clip, 0.0)
                    + jnp.where(lane == 2, kl_seg, 0.0)
                    + jnp.where(lane == 3, bce_seg, 0.0))


def _fused_sums(xc_t, xs_t, y_t, ys_t, wm):
    c, b = xc_t.shape
    n = xs_t.shape[1]
    kernel = functools.partial(_fused_loss_kernel, wm=wm)
    sums = pl.pallas_call(
        kernel,
        out_shape=jax.ShapeDtypeStruct((1, 4), jnp.float32),
        grid=(1,),
        in_specs=[pl.BlockSpec((c, b), lambda i: (0, 0)),
                  pl.BlockSpec((c, n), lambda i: (0, 0)),
                  pl.BlockSpec((c, b), lambda i: (0, 0)),
                  pl.BlockSpec((c, n), lambda i: (0, 0))],
        out_specs=pl.BlockSpec((1, 4), lambda i: (0, 0)),
        compiler_params=pltpu.CompilerParams(
            dimension_semantics=("arbitrary",)),
    )(xc_t, xs_t, y_t, ys_t)
    return sums[0, 0], sums[0, 1], sums[0, 2], sums[0, 3]


# ---------------------------------------------------------------------------
# HMSSEDLoss forward
# ---------------------------------------------------------------------------
# (loss types for clipwise, weights for clipwise, loss types for segmentwise,
#  weights for segmentwise) — mirrors the torch buffers in __init__.
_LOSS_CONFIG = {
    'ver_1': (('kl',), (1.0,), ('kl',), (1.0,)),
    'ver_2': (('kl',), (1.0,), ('kl',), (5.0,)),
    'ver_3': (('bce',), (1.0,), ('bce',), (1.0,)),
    'ver_4': (('kl', 'bce'), (1.0, 1.0), ('kl', 'bce'), (1.0, 1.0)),
    'ver_5': (('kl', 'bce'), (1.0, 5.0), ('kl', 'bce'), (3.0, 3.0)),
}


def hms_sed_loss(clipwise_output, segmentwise_output, y_true, ver='ver_5'):
    clip_types, clip_w, seg_types, seg_w = _LOSS_CONFIG[ver]
    b, h, w = segmentwise_output.shape
    c = clipwise_output.shape[1]

    # central 10-out-of-50-second window along W (same integer math as
    # PyTorch; python slicing clamps end at w just like mask[:, :, start:end])
    middle = w / 2
    window_10s = 10 / 50 * w
    start = int(middle - window_10s / 2)
    end = min(int(start + window_10s) + 1, w)
    wm = end - start
    n_masked = b * h * wm

    # Wrapper-side layout plumbing: classes -> sublanes, batch(*time) -> lanes,
    # and the window sliced BEFORE the kernel so only contributing elements
    # are DMA'd / computed on.
    xc_t = clipwise_output.T                                       # (C, B)
    seg_win = segmentwise_output[:, :, start:end]                  # (B, C, Wm)
    xs_t = jnp.transpose(seg_win, (1, 0, 2)).reshape(h, b * wm)    # (C, B*Wm)
    y_t = y_true.T                                                 # (C, B)
    ys_t = jnp.broadcast_to(y_t[:, :, None], (h, b, wm)).reshape(h, b * wm)

    kl_clip_sum, bce_clip_sum, kl_seg_sum, bce_seg_sum = _fused_sums(
        xc_t, xs_t, y_t, ys_t, wm)

    loss_dict = {}
    loss_list = []
    for t, wgt in zip(clip_types, clip_w):
        if t == 'kl':
            # KLDivLoss(reduction='batchmean') divides the sum by batch size.
            loss = kl_clip_sum / b * wgt
            loss_dict['KLDivLoss_clipwise'] = loss
        else:
            # BCEWithLogitsLoss(reduction='mean') over all B*C elements.
            loss = bce_clip_sum / (b * c) * wgt
            loss_dict['BCEWithLogitsLoss_clipwise'] = loss
        loss_list.append(loss)

    for t, wgt in zip(seg_types, seg_w):
        if t == 'kl':
            # After boolean masking the tensor is 1-D of length n_masked, so
            # 'batchmean' divides by n_masked.
            loss = kl_seg_sum / n_masked * wgt
            loss_dict['KLDivLoss_segmentwise'] = loss
        else:
            # reduction='none' then loss[mask].mean()
            loss = bce_seg_sum / n_masked * wgt
            loss_dict['BCEWithLogitsLoss_segmentwise'] = loss
        loss_list.append(loss)

    total = jnp.sum(jnp.stack(loss_list))
    loss_dict['loss'] = total
    return loss_dict, total


# ---------------------------------------------------------------------------
# Pure-JAX reference (correctness check / XLA baseline)
# ---------------------------------------------------------------------------
def _reference(clipwise, segmentwise, y_true, ver):
    clip_types, clip_w, seg_types, seg_w = _LOSS_CONFIG[ver]
    b, h, w = segmentwise.shape
    start = int(w / 2 - (10 / 50 * w) / 2)
    end = min(int(start + 10 / 50 * w) + 1, w)

    logp_c = jax.nn.log_softmax(clipwise, axis=1)
    kl_c = jnp.sum(_kl_pointwise(logp_c, y_true)) / b
    bce_c = jnp.mean(_bce_pointwise(clipwise, y_true))

    y3 = jnp.broadcast_to(y_true[:, :, None], (b, h, w))
    logp_s = jax.nn.log_softmax(segmentwise, axis=1)
    kl_pt = _kl_pointwise(logp_s, y3)[:, :, start:end]
    bce_pt = _bce_pointwise(segmentwise, y3)[:, :, start:end]
    kl_s = jnp.mean(kl_pt)    # sum / n_masked
    bce_s = jnp.mean(bce_pt)

    total = 0.0
    for t, wgt in zip(clip_types, clip_w):
        total = total + (kl_c if t == 'kl' else bce_c) * wgt
    for t, wgt in zip(seg_types, seg_w):
        total = total + (kl_s if t == 'kl' else bce_s) * wgt
    return total


if __name__ == "__main__":
    key = jax.random.PRNGKey(0)
    k1, k2, k3 = jax.random.split(key, 3)
    B, C, W = 2, 6, 16   # 6 HMS classes, 16 segmentwise time steps
    clipwise = jax.random.normal(k1, (B, C), dtype=jnp.float32)
    segmentwise = jax.random.normal(k2, (B, C, W), dtype=jnp.float32)
    # y_true are target class probabilities (rows sum to 1)
    y_true = jax.nn.softmax(jax.random.normal(k3, (B, C), dtype=jnp.float32), axis=1)

    loss_dict, total = hms_sed_loss(clipwise, segmentwise, y_true, ver='ver_5')
    total = jax.block_until_ready(total)

    ref_total = jax.block_until_ready(_reference(clipwise, segmentwise, y_true, 'ver_5'))
    assert jnp.allclose(total, ref_total, rtol=1e-4, atol=1e-5), (total, ref_total)

    print("KERNEL_OK")
</pallas_src>

<mosaic_0001>
module attributes {stable_mosaic.version = 11 : i64} {
  func.func @_fused_loss_kernel(%arg0: i32, %arg1: memref<6x2xf32, #tpu.memory_space<vmem>>, %arg2: memref<6x8xf32, #tpu.memory_space<vmem>>, %arg3: memref<6x2xf32, #tpu.memory_space<vmem>>, %arg4: memref<6x8xf32, #tpu.memory_space<vmem>>, %arg5: memref<1x4xf32, #tpu.memory_space<vmem>>) attributes {dimension_semantics = [#tpu.dimension_semantics<arbitrary>], iteration_bounds = array<i64: 1>, scalar_prefetch = 0 : i64, scratch_operands = 0 : i64, tpu.core_type = #tpu.core_type<tc>, window_params = [{pipeline_mode = #tpu.pipeline_mode<synchronous>, transform_indices = @transform_0, window_bounds = array<i64: 6, 2>}, {pipeline_mode = #tpu.pipeline_mode<synchronous>, transform_indices = @transform_1, window_bounds = array<i64: 6, 8>}, {pipeline_mode = #tpu.pipeline_mode<synchronous>, transform_indices = @transform_2, window_bounds = array<i64: 6, 2>}, {pipeline_mode = #tpu.pipeline_mode<synchronous>, transform_indices = @transform_3, window_bounds = array<i64: 6, 8>}, {pipeline_mode = #tpu.pipeline_mode<synchronous>, transform_indices = @transform_4, window_bounds = array<i64: 1, 4>}]} {
    %c0 = arith.constant 0 : index
    %c0_0 = arith.constant 0 : index
    %0 = vector.load %arg1[%c0, %c0_0] : memref<6x2xf32, #tpu.memory_space<vmem>>, vector<6x2xf32>
    %c0_1 = arith.constant 0 : index
    %c0_2 = arith.constant 0 : index
    %1 = vector.load %arg2[%c0_1, %c0_2] : memref<6x8xf32, #tpu.memory_space<vmem>>, vector<6x8xf32>
    %c0_3 = arith.constant 0 : index
    %c0_4 = arith.constant 0 : index
    %2 = vector.load %arg3[%c0_3, %c0_4] : memref<6x2xf32, #tpu.memory_space<vmem>>, vector<6x2xf32>
    %c0_5 = arith.constant 0 : index
    %c0_6 = arith.constant 0 : index
    %3 = vector.load %arg4[%c0_5, %c0_6] : memref<6x8xf32, #tpu.memory_space<vmem>>, vector<6x8xf32>
    %cst = arith.constant dense<0xFF800000> : vector<2xf32>
    %4 = vector.multi_reduction <maximumf>, %0, %cst [0] : vector<6x2xf32> to vector<2xf32>
    %5 = vector.shape_cast %4 : vector<2xf32> to vector<1x2xf32>
    %6 = vector.broadcast %5 : vector<1x2xf32> to vector<6x2xf32>
    %7 = arith.subf %0, %6 : vector<6x2xf32>
    %8 = math.exp %7 : vector<6x2xf32>
    %cst_7 = arith.constant dense<0.000000e+00> : vector<2xf32>
    %9 = vector.multi_reduction <add>, %8, %cst_7 [0] : vector<6x2xf32> to vector<2xf32>
    %10 = vector.shape_cast %9 : vector<2xf32> to vector<1x2xf32>
    %11 = math.log %10 : vector<1x2xf32>
    %12 = vector.broadcast %11 : vector<1x2xf32> to vector<6x2xf32>
    %13 = arith.subf %7, %12 : vector<6x2xf32>
    %cst_8 = arith.constant dense<0xFF800000> : vector<8xf32>
    %14 = vector.multi_reduction <maximumf>, %1, %cst_8 [0] : vector<6x8xf32> to vector<8xf32>
    %15 = vector.shape_cast %14 : vector<8xf32> to vector<1x8xf32>
    %16 = vector.broadcast %15 : vector<1x8xf32> to vector<6x8xf32>
    %17 = arith.subf %1, %16 : vector<6x8xf32>
    %18 = math.exp %17 : vector<6x8xf32>
    %cst_9 = arith.constant dense<0.000000e+00> : vector<8xf32>
    %19 = vector.multi_reduction <add>, %18, %cst_9 [0] : vector<6x8xf32> to vector<8xf32>
    %20 = vector.shape_cast %19 : vector<8xf32> to vector<1x8xf32>
    %21 = math.log %20 : vector<1x8xf32>
    %22 = vector.broadcast %21 : vector<1x8xf32> to vector<6x8xf32>
    %23 = arith.subf %17, %22 : vector<6x8xf32>
    %cst_10 = arith.constant 0.000000e+00 : f32
    %24 = vector.broadcast %cst_10 : f32 to vector<6x2xf32>
    %25 = arith.cmpf ogt, %2, %24 : vector<6x2xf32>
    %cst_11 = arith.constant 1.000000e+00 : f32
    %26 = vector.broadcast %cst_11 : f32 to vector<6x2xf32>
    %27 = arith.select %25, %2, %26 : vector<6x2xi1>, vector<6x2xf32>
    %cst_12 = arith.constant 0.000000e+00 : f32
    %28 = vector.broadcast %cst_12 : f32 to vector<6x2xf32>
    %29 = arith.cmpf ogt, %2, %28 : vector<6x2xf32>
    %30 = math.log %27 : vector<6x2xf32>
    %31 = arith.mulf %2, %30 : vector<6x2xf32>
    %cst_13 = arith.constant 0.000000e+00 : f32
    %32 = vector.broadcast %cst_13 : f32 to vector<6x2xf32>
    %33 = arith.select %29, %31, %32 : vector<6x2xi1>, vector<6x2xf32>
    %34 = vector.shape_cast %33 : vector<6x2xf32> to vector<1x6x2xf32>
    %cst_14 = arith.constant dense<0.000000e+00> : vector<1xf32>
    %35 = vector.multi_reduction <add>, %34, %cst_14 [1, 2] : vector<1x6x2xf32> to vector<1xf32>
    %36 = vector.shape_cast %35 : vector<1xf32> to vector<1x1x1xf32>
    %37 = vector.extract %36[0, 0, 0] : f32 from vector<1x1x1xf32>
    %38 = arith.mulf %2, %13 : vector<6x2xf32>
    %39 = vector.shape_cast %38 : vector<6x2xf32> to vector<1x6x2xf32>
    %cst_15 = arith.constant dense<0.000000e+00> : vector<1xf32>
    %40 = vector.multi_reduction <add>, %39, %cst_15 [1, 2] : vector<1x6x2xf32> to vector<1xf32>
    %41 = vector.shape_cast %40 : vector<1xf32> to vector<1x1x1xf32>
    %42 = vector.extract %41[0, 0, 0] : f32 from vector<1x1x1xf32>
    %43 = arith.subf %37, %42 : f32
    %cst_16 = arith.constant 4.000000e+00 : f32
    %44 = arith.mulf %cst_16, %37 : f32
    %45 = arith.mulf %3, %23 : vector<6x8xf32>
    %46 = vector.shape_cast %45 : vector<6x8xf32> to vector<1x6x8xf32>
    %cst_17 = arith.constant dense<0.000000e+00> : vector<1xf32>
    %47 = vector.multi_reduction <add>, %46, %cst_17 [1, 2] : vector<1x6x8xf32> to vector<1xf32>
    %48 = vector.shape_cast %47 : vector<1xf32> to vector<1x1x1xf32>
    %49 = vector.extract %48[0, 0, 0] : f32 from vector<1x1x1xf32>
    %50 = arith.subf %44, %49 : f32
    %cst_18 = arith.constant 0.000000e+00 : f32
    %51 = vector.broadcast %cst_18 : f32 to vector<6x2xf32>
    %52 = arith.maximumf %0, %51 : vector<6x2xf32>
    %53 = arith.mulf %0, %2 : vector<6x2xf32>
    %54 = arith.subf %52, %53 : vector<6x2xf32>
    %55 = math.absf %0 : vector<6x2xf32>
    %cst_19 = arith.constant 0.000000e+00 : f32
    %56 = vector.broadcast %cst_19 : f32 to vector<6x2xf32>
    %57 = arith.subf %56, %55 : vector<6x2xf32>
    %58 = math.exp %57 : vector<6x2xf32>
    %59 = math.log1p %58 : vector<6x2xf32>
    %60 = arith.addf %54, %59 : vector<6x2xf32>
    %61 = vector.shape_cast %60 : vector<6x2xf32> to vector<1x6x2xf32>
    %cst_20 = arith.constant dense<0.000000e+00> : vector<1xf32>
    %62 = vector.multi_reduction <add>, %61, %cst_20 [1, 2] : vector<1x6x2xf32> to vector<1xf32>
    %63 = vector.shape_cast %62 : vector<1xf32> to vector<1x1x1xf32>
    %64 = vector.extract %63[0, 0, 0] : f32 from vector<1x1x1xf32>
    %cst_21 = arith.constant 0.000000e+00 : f32
    %65 = vector.broadcast %cst_21 : f32 to vector<6x8xf32>
    %66 = arith.maximumf %1, %65 : vector<6x8xf32>
    %67 = arith.mulf %1, %3 : vector<6x8xf32>
    %68 = arith.subf %66, %67 : vector<6x8xf32>
    %69 = math.absf %1 : vector<6x8xf32>
    %cst_22 = arith.constant 0.000000e+00 : f32
    %70 = vector.broadcast %cst_22 : f32 to vector<6x8xf32>
    %71 = arith.subf %70, %69 : vector<6x8xf32>
    %72 = math.exp %71 : vector<6x8xf32>
    %73 = math.log1p %72 : vector<6x8xf32>
    %74 = arith.addf %68, %73 : vector<6x8xf32>
    %75 = vector.shape_cast %74 : vector<6x8xf32> to vector<1x6x8xf32>
    %cst_23 = arith.constant dense<0.000000e+00> : vector<1xf32>
    %76 = vector.multi_reduction <add>, %75, %cst_23 [1, 2] : vector<1x6x8xf32> to vector<1xf32>
    %77 = vector.shape_cast %76 : vector<1xf32> to vector<1x1x1xf32>
    %78 = vector.extract %77[0, 0, 0] : f32 from vector<1x1x1xf32>
    %79 = tpu.iota {dimensions = array<i32: 1>} : vector<1x4xi32>
    %c0_i32 = arith.constant 0 : i32
    %80 = vector.broadcast %c0_i32 : i32 to vector<1x4xi32>
    %81 = arith.cmpi eq, %79, %80 : vector<1x4xi32>
    %cst_24 = arith.constant 0.000000e+00 : f32
    %82 = vector.broadcast %43 : f32 to vector<1x4xf32>
    %83 = vector.broadcast %cst_24 : f32 to vector<1x4xf32>
    %84 = arith.select %81, %82, %83 : vector<1x4xi1>, vector<1x4xf32>
    %c1_i32 = arith.constant 1 : i32
    %85 = vector.broadcast %c1_i32 : i32 to vector<1x4xi32>
    %86 = arith.cmpi eq, %79, %85 : vector<1x4xi32>
    %cst_25 = arith.constant 0.000000e+00 : f32
    %87 = vector.broadcast %64 : f32 to vector<1x4xf32>
    %88 = vector.broadcast %cst_25 : f32 to vector<1x4xf32>
    %89 = arith.select %86, %87, %88 : vector<1x4xi1>, vector<1x4xf32>
    %90 = arith.addf %84, %89 : vector<1x4xf32>
    %c2_i32 = arith.constant 2 : i32
    %91 = vector.broadcast %c2_i32 : i32 to vector<1x4xi32>
    %92 = arith.cmpi eq, %79, %91 : vector<1x4xi32>
    %cst_26 = arith.constant 0.000000e+00 : f32
    %93 = vector.broadcast %50 : f32 to vector<1x4xf32>
    %94 = vector.broadcast %cst_26 : f32 to vector<1x4xf32>
    %95 = arith.select %92, %93, %94 : vector<1x4xi1>, vector<1x4xf32>
    %96 = arith.addf %90, %95 : vector<1x4xf32>
    %c3_i32 = arith.constant 3 : i32
    %97 = vector.broadcast %c3_i32 : i32 to vector<1x4xi32>
    %98 = arith.cmpi eq, %79, %97 : vector<1x4xi32>
    %cst_27 = arith.constant 0.000000e+00 : f32
    %99 = vector.broadcast %78 : f32 to vector<1x4xf32>
    %100 = vector.broadcast %cst_27 : f32 to vector<1x4xf32>
    %101 = arith.select %98, %99, %100 : vector<1x4xi1>, vector<1x4xf32>
    %102 = arith.addf %96, %101 : vector<1x4xf32>
    %c0_28 = arith.constant 0 : index
    %c0_29 = arith.constant 0 : index
    %103 = vector.load %arg5[%c0_28, %c0_29] : memref<1x4xf32, #tpu.memory_space<vmem>>, vector<1x4xf32>
    tpu.vector_store %arg5[%c0_28, %c0_29], %102 {strides = array<i32>} : memref<1x4xf32, #tpu.memory_space<vmem>>, vector<1x4xf32>,
    return
  }
  func.func @transform_0(%arg0: i32) -> (i32, i32) {
    %c0_i32 = arith.constant 0 : i32
    %c0_i32_0 = arith.constant 0 : i32
    %c0_i32_1 = arith.constant 0 : i32
    return %c0_i32, %c0_i32_0 : i32, i32
  }
  func.func @transform_1(%arg0: i32) -> (i32, i32) {
    %c0_i32 = arith.constant 0 : i32
    %c0_i32_0 = arith.constant 0 : i32
    %c0_i32_1 = arith.constant 0 : i32
    return %c0_i32, %c0_i32_0 : i32, i32
  }
  func.func @transform_2(%arg0: i32) -> (i32, i32) {
    %c0_i32 = arith.constant 0 : i32
    %c0_i32_0 = arith.constant 0 : i32
    %c0_i32_1 = arith.constant 0 : i32
    return %c0_i32, %c0_i32_0 : i32, i32
  }
  func.func @transform_3(%arg0: i32) -> (i32, i32) {
    %c0_i32 = arith.constant 0 : i32
    %c0_i32_0 = arith.constant 0 : i32
    %c0_i32_1 = arith.constant 0 : i32
    return %c0_i32, %c0_i32_0 : i32, i32
  }
  func.func @transform_4(%arg0: i32) -> (i32, i32) {
    %c0_i32 = arith.constant 0 : i32
    %c0_i32_0 = arith.constant 0 : i32
    %c0_i32_1 = arith.constant 0 : i32
    return %c0_i32, %c0_i32_0 : i32, i32
  }
}

</mosaic_0001>

<llo_original>
// kernel: tpu_custom_call.1
$region0: #{tpu_custom_call.1}
  #allocation0 [shape = 'u32[]', space=smem, size = 0x4, offset = 0x4, fixed_abs, tag = 'smem constant byte address 0x4 - core index']
  #allocation1 [shape = 'u32[144,128]{1,0:T(1,128)}', space=vmem, size = 0x12000, scoped, tag = 'internal scratch']
  %s0 = inlined_call_operand.vmem [shape: f32[6,2], index: 0, kind: input, shape index: {}]
  %s1 = inlined_call_operand.vmem [shape: f32[6,8], index: 1, kind: input, shape index: {}]
  %s2 = inlined_call_operand.vmem [shape: f32[6,2], index: 2, kind: input, shape index: {}]
  %s3 = inlined_call_operand.vmem [shape: f32[6,8], index: 3, kind: input, shape index: {}]
  %s4 = inlined_call_operand.hbm [shape: f32[1,4], index: 4, kind: output, shape index: {}]
  %s5 = sld [smem:[#allocation0]]
  $region26: #{tpu_custom_call.1} parent=0
    _
  %s7 = ssub.s32 1, %s5
  %s8 = scalar_select 0, %s7, %s5
  $region1: #{tpu_custom_call.1} parent=0
    #allocation2 [shape = 'u8[512]{0}', space=vmem, size = 0x400, scoped, tag = 'output window, operand 0, single buffered']
    #allocation3 [shape = 's32[1]{0}', space=sflag, size = 0x4, scoped, tag = 'scoped memory for tpu_custom_call.1']
    %9 = vsyncpa [#allocation3], 0
    // Predicated region
    $region2: #{tpu_custom_call.1} parent=1 // pred_check
      _
    $region3: #{tpu_custom_call.1} parent=1 // pred_check_branch
      %11 = sbr.rel (0) target = $region5
    $region4: #{tpu_custom_call.1} parent=1 // pred_region
      _
    $region5: #{tpu_custom_call.1} parent=1 // pred_fallthru
      _
    // Predicated region
    $region6: #{tpu_custom_call.1} parent=1 // pred_check
      _
    $region7: #{tpu_custom_call.1} parent=1 // pred_check_branch
      %13 = sbr.rel (0) target = $region9
    $region8: #{tpu_custom_call.1} parent=1 // pred_region
      _
    $region9: #{tpu_custom_call.1} parent=1 // pred_fallthru
      _
    // Predicated region
    $region10: #{tpu_custom_call.1} parent=1 // pred_check
      _
    $region11: #{tpu_custom_call.1} parent=1 // pred_check_branch
      %15 = sbr.rel (0) target = $region13
    $region12: #{tpu_custom_call.1} parent=1 // pred_region
      _
    $region13: #{tpu_custom_call.1} parent=1 // pred_fallthru
      _
    // Predicated region
    $region14: #{tpu_custom_call.1} parent=1 // pred_check
      _
    $region15: #{tpu_custom_call.1} parent=1 // pred_check_branch
      %17 = sbr.rel (0) target = $region17
    $region16: #{tpu_custom_call.1} parent=1 // pred_region
      _
    $region17: #{tpu_custom_call.1} parent=1 // pred_fallthru
      _
    %v18 = vld [vmem:[%s0] sm:$0x3f]
    %v19 = vld [vmem:[%s1] sm:$0x3f]
    %v20 = vld [vmem:[%s2] sm:$0x3f]
    %v21 = vld [vmem:[%s3] sm:$0x3f]
    %vm22 = vcmask 13312
    %v23 = vsel %vm22, %v18, -inf
    %v24 = vrot.slane %v23, 4
    %v25 = vmax.f32 %v23, %v24
    %v26 = vrot.slane %v25, 2
    %v27 = vmax.f32 %v25, %v26
    %v28 = vrot.slane %v27, 1
    %v29 = vmax.f32 %v27, %v28
    %v30 = vsub.f32 %v18, %v29
    %v31 = vmul.f32 %v30, 1.442695
    %v32 = vpow.pop %v31
    %v33 = vsel %vm22, %v32, 0.0
    %v34 = vrot.slane %v33, 4
    %v35 = vadd.f32 %v33, %v34
    %v36 = vrot.slane %v35, 2
    %v37 = vadd.f32 %v35, %v36
    %v38 = vrot.slane %v37, 1
    %v39 = vadd.f32 %v37, %v38
    %v40 = vlog2.pop %v39
    %v41 = vmul.f32 %v40, 0.6931472
    %v42 = vsub.f32 %v30, %v41
    %vm43 = vcmask 62464
    %v44 = vsel %vm43, %v19, -inf
    %v45 = vrot.slane %v44, 4
    %v46 = vmax.f32 %v44, %v45
    %v47 = vrot.slane %v46, 2
    %v48 = vmax.f32 %v46, %v47
    %v49 = vrot.slane %v48, 1
    %v50 = vmax.f32 %v48, %v49
    %v51 = vsub.f32 %v19, %v50
    %v52 = vmul.f32 %v51, 1.442695
    %v53 = vpow.pop %v52
    %v54 = vsel %vm43, %v53, 0.0
    %v55 = vrot.slane %v54, 4
    %v56 = vadd.f32 %v54, %v55
    %v57 = vrot.slane %v56, 2
    %v58 = vadd.f32 %v56, %v57
    %v59 = vrot.slane %v58, 1
    %v60 = vadd.f32 %v58, %v59
    %v61 = vlog2.pop %v60
    %v62 = vmul.f32 %v61, 0.6931472
    %v63 = vsub.f32 %v51, %v62
    %vm64 = vcmp.gt.f32.partialorder %v20, 0.0
    %v65 = vsel %vm64, %v20, 1.0
    %v66 = vlog2.pop %v65
    %v67 = vmul.f32 %v66, 0.6931472
    %v68 = vmul.f32 %v20, %v67
    %v69 = vsel %vm64, %v68, 0.0
    %v70 = vsel %vm22, %v69, 0.0
    %71 = vadd.xlane.f32.xlu0 %v70
    %v72 = vpop.xlane.xlu0 %71
    %v73 = vrot.slane %v72, 4
    %v74 = vadd.f32 %v72, %v73
    %v75 = vrot.slane %v74, 2
    %v76 = vadd.f32 %v74, %v75
    %v77 = vrot.slane %v76, 1
    %v78 = vadd.f32 %v76, %v77
    %s79 = vtos %v78
    %v80 = vmul.f32 %v20, %v42
    %v81 = vsel %vm22, %v80, 0.0
    %82 = vadd.xlane.f32.xlu0 %v81
    %v83 = vpop.xlane.xlu0 %82
    %v84 = vrot.slane %v83, 4
    %v85 = vadd.f32 %v83, %v84
    %v86 = vrot.slane %v85, 2
    %v87 = vadd.f32 %v85, %v86
    %v88 = vrot.slane %v87, 1
    %v89 = vadd.f32 %v87, %v88
    %s90 = vtos %v89
    %s91 = ssub.f32 %s79, %s90
    %s92 = smul.f32 %s79, 4.0
    %v93 = vmul.f32 %v21, %v63
    %v94 = vsel %vm43, %v93, 0.0
    %95 = vadd.xlane.f32.xlu0 %v94
    %v96 = vpop.xlane.xlu0 %95
    %v97 = vrot.slane %v96, 4
    %v98 = vadd.f32 %v96, %v97
    %v99 = vrot.slane %v98, 2
    %v100 = vadd.f32 %v98, %v99
    %v101 = vrot.slane %v100, 1
    %v102 = vadd.f32 %v100, %v101
    %s103 = vtos %v102
    %s104 = ssub.f32 %s92, %s103
    %v105 = vmax.f32 %v18, 0.0
    %v106 = vmul.f32 %v18, %v20
    %v107 = vsub.f32 %v105, %v106
    %v108 = vand.u32 2147483647, %v18
    %v109 = vsub.f32 0.0, %v108
    %v110 = vmul.f32 %v109, 1.442695
    %v111 = vpow.pop %v110
    %v112 = vadd.f32 %v111, 1.0
    %v113 = vlog2.pop %v112
    %v114 = vmul.f32 %v113, 0.6931472
    %v115 = vmul.f32 -0.5, %v111
    %v116 = vadd.f32 %v115, 1.0
    %v117 = vmul.f32 %v116, %v111
    %v118 = vand.u32 2147483647, %v111
    %vm119 = vcmp.lt.f32.partialorder %v118, 0.0004427343
    %v120 = vsel %vm119, %v117, %v114
    %v121 = vadd.f32 %v107, %v120
    %v122 = vsel %vm22, %v121, 0.0
    %123 = vadd.xlane.f32.xlu0 %v122
    %v124 = vpop.xlane.xlu0 %123
    %v125 = vrot.slane %v124, 4
    %v126 = vadd.f32 %v124, %v125
    %v127 = vrot.slane %v126, 2
    %v128 = vadd.f32 %v126, %v127
    %v129 = vrot.slane %v128, 1
    %v130 = vadd.f32 %v128, %v129
    %s131 = vtos %v130
    %v132 = vmax.f32 %v19, 0.0
    %v133 = vmul.f32 %v19, %v21
    %v134 = vsub.f32 %v132, %v133
    %v135 = vand.u32 2147483647, %v19
    %v136 = vsub.f32 0.0, %v135
    %v137 = vmul.f32 %v136, 1.442695
    %v138 = vpow.pop %v137
    %v139 = vadd.f32 %v138, 1.0
    %v140 = vlog2.pop %v139
    %v141 = vmul.f32 %v140, 0.6931472
    %v142 = vmul.f32 -0.5, %v138
    %v143 = vadd.f32 %v142, 1.0
    %v144 = vmul.f32 %v143, %v138
    %v145 = vand.u32 2147483647, %v138
    %vm146 = vcmp.lt.f32.partialorder %v145, 0.0004427343
    %v147 = vsel %vm146, %v144, %v141
    %v148 = vadd.f32 %v134, %v147
    %v149 = vsel %vm43, %v148, 0.0
    %150 = vadd.xlane.f32.xlu0 %v149
    %v151 = vpop.xlane.xlu0 %150
    %v152 = vrot.slane %v151, 4
    %v153 = vadd.f32 %v151, %v152
    %v154 = vrot.slane %v153, 2
    %v155 = vadd.f32 %v153, %v154
    %v156 = vrot.slane %v155, 1
    %v157 = vadd.f32 %v155, %v156
    %s158 = vtos %v157
    %v159 = vlaneseq
    %v160 = vand.u32 %v159, 127
    %vm161 = vcmp.eq.s32.totalorder %v160, 0
    %v162 = vstv %s91
    %v163 = vsel %vm161, %v162, 0.0
    %vm164 = vcmp.eq.s32.totalorder %v160, 1
    %v165 = vstv %s131
    %v166 = vsel %vm164, %v165, 0.0
    %v167 = vadd.f32 %v163, %v166
    %vm168 = vcmp.eq.s32.totalorder %v160, 2
    %v169 = vstv %s104
    %v170 = vsel %vm168, %v169, 0.0
    %v171 = vadd.f32 %v167, %v170
    %vm172 = vcmp.eq.s32.totalorder %v160, 3
    %v173 = vstv %s158
    %v174 = vsel %vm172, %v173, 0.0
    %v175 = vadd.f32 %v171, %v174
    %vm176 = vcmask 24576
    %177 = vst.msk [vmem:[#allocation2] sm:$0x1] %vm176, %v175
    // Predicated region
    $region18: #{tpu_custom_call.1} parent=1 // pred_check
      _
    $region19: #{tpu_custom_call.1} parent=1 // pred_check_branch
      %179 = sbr.rel (0) target = $region21
    $region20: #{tpu_custom_call.1} parent=1 // pred_region
      %s181 = ssub.s32 16, 16
      %182 = vsyncadd [#allocation3], %s181
      %s184 = sshll.u32 [#allocation2], 4
      %s185 = int_to_ptr.vmem [resolvable:$true] %s184
      %187 = dma.vmem_to_hbm [thread:$0]  %s185, 16, %s4, [#allocation3]
    $region21: #{tpu_custom_call.1} parent=1 // pred_fallthru
      _
    // Predicated region
    $region22: #{tpu_custom_call.1} parent=1 // pred_check
      _
    $region23: #{tpu_custom_call.1} parent=1 // pred_check_branch
      %189 = sbr.rel (0) target = $region25
    $region24: #{tpu_custom_call.1} parent=1 // pred_region
      %190 = dma.done [#allocation3], 16
    $region25: #{tpu_custom_call.1} parent=1 // pred_fallthru
      _
    %191 = vsyncpa [#allocation3], 1

</llo_original>
